<compile_context>
chip_gen: v5e
topology: v5e:2x2
jax: 0.10.0
libtpu: 0.0.40
codegen_flags: <defaults>
</compile_context>

<pallas_src>
import functools

import jax
import jax.numpy as jnp
from jax.experimental import pallas as pl
from jax.experimental.pallas import tpu as pltpu


# ---------------------------------------------------------------------------
# fused kernel: conv3x3 + bias + ReLU + global-avg-pool + all heads
# one grid step == TB batch elements (all num_inputs images for each of them)
# ---------------------------------------------------------------------------
def _fused_classifier_kernel(x_ref, w_ref, cb_ref, wh_ref, bh_ref, o_ref, *,
                             tb, num_inputs, H, W, Wp):
    L = H * Wp                       # rows covering output h in [0, H)
    inv_hw = 1.0 / float(H * W)

    # Validity / scale row for the masked global average pool (built once).
    # Padded position p = h*Wp + wp is a real output position iff wp < W.
    lane = jax.lax.broadcasted_iota(jnp.int32, (1, L), 1)
    pool_row = ((lane % Wp) < W).astype(jnp.float32) * inv_hw        # [1, L]

    w2 = w_ref[...]                                                  # [Cout, 9C] bf16
    cb = cb_ref[...]                                                 # [Cout, 1]  f32

    rows = []
    for b in range(tb):
        cols = []
        for i in range(num_inputs):
            x_bi = x_ref[b, i]                                       # [C, R] bf16
            # Shifted-tap slab: ONE K = 9*C contraction replaces 9 taps.
            slab = jnp.concatenate(
                [x_bi[:, kh * Wp + kw: kh * Wp + kw + L]
                 for kh in range(3) for kw in range(3)], axis=0)     # [9C, L]
            acc = jnp.dot(w2, slab,
                          preferred_element_type=jnp.float32)        # [Cout, L]
            acc = jnp.maximum(acc + cb, 0.0)                         # bias + ReLU
            # Masked global average pool as an MXU matvec over the lane axis
            # (contract acc's lane dim with pool_row's lane dim).
            pooled = jax.lax.dot_general(
                pool_row, acc, (((1,), (1,)), ((), ())),
                preferred_element_type=jnp.float32)                  # [1, Cout]
            cols.append(pooled)
        rows.append(jnp.concatenate(cols, axis=1))                   # [1, NI*Cout]
    feats = jnp.concatenate(rows, axis=0)                            # [TB, NI*Cout]

    # All classification heads fused into ONE lane-dense GEMM with M = TB.
    logits = jnp.dot(feats.astype(wh_ref.dtype), wh_ref[...],
                     preferred_element_type=jnp.float32) + bh_ref[...]
    o_ref[...] = logits[None]                                        # [1, TB, NPAD]


# ---------------------------------------------------------------------------
# ClassifierModel.forward
# ---------------------------------------------------------------------------
def classifier_forward(inputs_dict, params, num_inputs, output_naming_map):
    xs = list(inputs_dict.values())
    assert len(xs) == num_inputs
    x = jnp.stack(xs, axis=1)                      # [B, NI, C, H, W]
    B, NI, C, H, W = x.shape
    Hp, Wp = H + 2, W + 2
    L = H * Wp
    # lane-dense flattened-spatial axis, long enough for the largest tap shift
    R = -(-max(Hp * Wp, 2 * Wp + 2 + L) // 128) * 128

    conv_w = params["conv_w"]                      # [Cout, C, 3, 3]
    conv_b = params["conv_b"]                      # [Cout]
    Cout = conv_w.shape[0]

    # ---- input prep: halo pad, flatten spatial onto the LANE axis, bf16 ----
    xp = jnp.pad(x, ((0, 0), (0, 0), (0, 0), (1, 1), (1, 1)))        # halo pad
    x_flat = xp.reshape(B, NI, C, Hp * Wp)
    x_flat = jnp.pad(x_flat, ((0, 0), (0, 0), (0, 0), (0, R - Hp * Wp)))
    x_flat = x_flat.astype(jnp.bfloat16)           # bf16 operands, f32 accumulate

    # ---- batch blocking: TB rows per grid step (amortize step overhead),
    #      while keeping several grid steps per TensorCore on v7x ----
    TB = max(1, min(32, B // 8))
    G = -(-B // TB)
    B_pad = G * TB
    if B_pad != B:
        x_flat = jnp.pad(x_flat, ((0, B_pad - B), (0, 0), (0, 0), (0, 0)))

    # fused conv weights: single [Cout, 9*C] matrix, columns ordered (kh,kw,c)
    # to match the slab's row order (tap-major, channel-minor)
    w2 = jnp.transpose(conv_w, (0, 2, 3, 1)).reshape(Cout, 9 * C).astype(jnp.bfloat16)
    cb = conv_b.reshape(Cout, 1).astype(jnp.float32)

    # ---- fuse every classification head into one lane-dense bf16 GEMM ----
    head_items = list(params["heads"].items())
    feat_dim = NI * Cout
    wh = jnp.concatenate([w.T for _, (w, _) in head_items], axis=1)  # [feat_dim, Ntot]
    bh = jnp.concatenate([b for _, (_, b) in head_items], axis=0)[None, :]
    n_tot = wh.shape[1]
    NPAD = -(-n_tot // 128) * 128
    wh = jnp.pad(wh, ((0, 0), (0, NPAD - n_tot))).astype(jnp.bfloat16)
    bh = jnp.pad(bh, ((0, 0), (0, NPAD - n_tot))).astype(jnp.float32)

    kernel = functools.partial(_fused_classifier_kernel,
                               tb=TB, num_inputs=NI, H=H, W=W, Wp=Wp)

    logits = pl.pallas_call(
        kernel,
        out_shape=jax.ShapeDtypeStruct((G, TB, NPAD), jnp.float32),
        grid_spec=pltpu.PrefetchScalarGridSpec(
            num_scalar_prefetch=0,
            grid=(G,),
            in_specs=[
                pl.BlockSpec((TB, NI, C, R), lambda g: (g, 0, 0, 0)),
                pl.BlockSpec((Cout, 9 * C), lambda g: (0, 0)),
                pl.BlockSpec((Cout, 1), lambda g: (0, 0)),
                pl.BlockSpec((feat_dim, NPAD), lambda g: (0, 0)),
                pl.BlockSpec((1, NPAD), lambda g: (0, 0)),
            ],
            out_specs=pl.BlockSpec((1, TB, NPAD), lambda g: (g, 0, 0)),
        ),
        compiler_params=pltpu.CompilerParams(
            dimension_semantics=("parallel",),      # megacore-shard batch steps
            vmem_limit_bytes=32 * 1024 * 1024,      # safe on v5e/v6e/v7x
        ),
    )(x_flat, w2, cb, wh, bh)

    logits = logits.reshape(B_pad, NPAD)[:B]
    out = {}
    off = 0
    for name, (w, _) in head_items:
        ncls = w.shape[0]
        out[output_naming_map[name]] = logits[:, off:off + ncls]
        off += ncls
    return out


# ---------------------------------------------------------------------------
# pure-JAX f32 reference (correctness sanity check)
# ---------------------------------------------------------------------------
def classifier_forward_ref(inputs_dict, params, num_inputs, output_naming_map):
    xs = list(inputs_dict.values())
    bs = xs[0].shape[0]
    x = jnp.concatenate(xs, axis=0)
    y = jax.lax.conv_general_dilated(
        x, params["conv_w"], window_strides=(1, 1), padding=((1, 1), (1, 1)),
        dimension_numbers=("NCHW", "OIHW", "NCHW"))
    y = y + params["conv_b"][None, :, None, None]
    y = jnp.maximum(y, 0.0)
    y = y.mean(axis=(2, 3))                      # adaptive avg pool + flatten
    Cout = y.shape[1]
    feats = (y.reshape(num_inputs, bs, Cout)
               .transpose(1, 0, 2)
               .reshape(bs, num_inputs * Cout))
    return {output_naming_map[k]: feats @ w.T + b
            for k, (w, b) in params["heads"].items()}


if __name__ == "__main__":
    key = jax.random.PRNGKey(0)

    # small shapes: batch=2, channels=4, spatial=16x16, two dict inputs
    bs, C, H, W = 2, 4, 16, 16
    Cout = 32
    num_inputs = 2
    output_naming_map = {"head1": "head.1", "head2": "head.2"}
    head_classes = {"head1": 3, "head2": 5}

    k_in1, k_in2, k_cw, k_cb, k_h = jax.random.split(key, 5)
    inputs = {
        "input.1": jax.random.normal(k_in1, (bs, C, H, W), jnp.float32),
        "input.2": jax.random.normal(k_in2, (bs, C, H, W), jnp.float32),
    }

    feat_dim = num_inputs * Cout
    head_keys = jax.random.split(k_h, 2 * len(head_classes))
    heads = {}
    for i, (name, ncls) in enumerate(head_classes.items()):
        wk, bk = head_keys[2 * i], head_keys[2 * i + 1]
        heads[name] = (
            jax.random.normal(wk, (ncls, feat_dim), jnp.float32) * 0.05,
            jax.random.normal(bk, (ncls,), jnp.float32) * 0.05,
        )
    params = {
        "conv_w": jax.random.normal(k_cw, (Cout, C, 3, 3), jnp.float32) * 0.1,
        "conv_b": jax.random.normal(k_cb, (Cout,), jnp.float32) * 0.1,
        "heads": heads,
    }

    out = classifier_forward(inputs, params, num_inputs, output_naming_map)
    out = jax.tree_util.tree_map(jax.block_until_ready, out)

    ref = classifier_forward_ref(inputs, params, num_inputs, output_naming_map)
    for k in ref:
        assert out[k].shape == ref[k].shape, k
        # conv + head operands are bf16 on the MXU (f32 accumulate), so the
        # tolerance is loosened relative to a pure-f32 check.
        assert jnp.allclose(out[k], ref[k], atol=2e-2, rtol=2e-2), k

    print("KERNEL_OK")
</pallas_src>

<mosaic_0001>
module attributes {stable_mosaic.version = 11 : i64} {
  func.func @_fused_classifier_kernel(%arg0: i32, %arg1: memref<1x2x4x384xbf16, #tpu.memory_space<vmem>>, %arg2: memref<32x36xbf16, #tpu.memory_space<vmem>>, %arg3: memref<32x1xf32, #tpu.memory_space<vmem>>, %arg4: memref<64x128xbf16, #tpu.memory_space<vmem>>, %arg5: memref<1x128xf32, #tpu.memory_space<vmem>>, %arg6: memref<1x1x128xf32, #tpu.memory_space<vmem>>) attributes {dimension_semantics = [#tpu.dimension_semantics<parallel>], iteration_bounds = array<i64: 2>, scalar_prefetch = 0 : i64, scratch_operands = 0 : i64, tpu.core_type = #tpu.core_type<tc>, window_params = [{transform_indices = @transform_0, window_bounds = array<i64: 1, 2, 4, 384>}, {pipeline_mode = #tpu.pipeline_mode<synchronous>, transform_indices = @transform_1, window_bounds = array<i64: 32, 36>}, {pipeline_mode = #tpu.pipeline_mode<synchronous>, transform_indices = @transform_2, window_bounds = array<i64: 32, 1>}, {pipeline_mode = #tpu.pipeline_mode<synchronous>, transform_indices = @transform_3, window_bounds = array<i64: 64, 128>}, {pipeline_mode = #tpu.pipeline_mode<synchronous>, transform_indices = @transform_4, window_bounds = array<i64: 1, 128>}, {transform_indices = @transform_5, window_bounds = array<i64: 1, 1, 128>}]} {
    %0 = tpu.iota {dimensions = array<i32: 1>} : vector<1x288xi32>
    %c18_i32 = arith.constant 18 : i32
    %c0_i32 = arith.constant 0 : i32
    %1 = arith.cmpi eq, %c18_i32, %c0_i32 : i32
    %c1_i32 = arith.constant 1 : i32
    %2 = arith.select %1, %c1_i32, %c18_i32 : i32
    %3 = vector.broadcast %2 : i32 to vector<1x288xi32>
    %4 = arith.remsi %0, %3 : vector<1x288xi32>
    %c0_i32_0 = arith.constant 0 : i32
    %5 = vector.broadcast %c0_i32_0 : i32 to vector<1x288xi32>
    %6 = arith.cmpi ne, %4, %5 : vector<1x288xi32>
    %c0_i32_1 = arith.constant 0 : i32
    %7 = vector.broadcast %c0_i32_1 : i32 to vector<1x288xi32>
    %8 = arith.cmpi slt, %4, %7 : vector<1x288xi32>
    %c0_i32_2 = arith.constant 0 : i32
    %9 = arith.cmpi slt, %2, %c0_i32_2 : i32
    %10 = vector.broadcast %9 : i1 to vector<1x288xi1>
    %11 = vector.broadcast %10 : vector<1x288xi1> to vector<1x288xi1>
    %12 = arith.xori %8, %11 : vector<1x288xi1>
    %13 = arith.andi %12, %6 : vector<1x288xi1>
    %14 = vector.broadcast %2 : i32 to vector<1x288xi32>
    %15 = arith.addi %4, %14 : vector<1x288xi32>
    %16 = arith.select %13, %15, %4 : vector<1x288xi1>, vector<1x288xi32>
    %c16_i32 = arith.constant 16 : i32
    %17 = vector.broadcast %c16_i32 : i32 to vector<1x288xi32>
    %18 = arith.cmpi slt, %16, %17 : vector<1x288xi32>
    %19 = arith.extui %18 : vector<1x288xi1> to vector<1x288xi32>
    %20 = arith.sitofp %19 : vector<1x288xi32> to vector<1x288xf32>
    %cst = arith.constant 3.906250e-03 : f32
    %21 = vector.broadcast %cst : f32 to vector<1x288xf32>
    %22 = arith.mulf %20, %21 : vector<1x288xf32>
    %c0 = arith.constant 0 : index
    %c0_3 = arith.constant 0 : index
    %23 = vector.load %arg2[%c0, %c0_3] : memref<32x36xbf16, #tpu.memory_space<vmem>>, vector<32x36xbf16>
    %c0_4 = arith.constant 0 : index
    %c0_5 = arith.constant 0 : index
    %24 = vector.load %arg3[%c0_4, %c0_5] : memref<32x1xf32, #tpu.memory_space<vmem>>, vector<32x1xf32>
    %c0_6 = arith.constant 0 : index
    %c0_7 = arith.constant 0 : index
    %c0_8 = arith.constant 0 : index
    %c0_9 = arith.constant 0 : index
    %25 = vector.load %arg1[%c0_6, %c0_7, %c0_8, %c0_9] : memref<1x2x4x384xbf16, #tpu.memory_space<vmem>>, vector<1x1x4x384xbf16>
    %26 = vector.shape_cast %25 : vector<1x1x4x384xbf16> to vector<4x384xbf16>
    %27 = vector.extract_strided_slice %26 {offsets = [0, 0], sizes = [4, 288], strides = [1, 1]} : vector<4x384xbf16> to vector<4x288xbf16>
    %28 = vector.extract_strided_slice %26 {offsets = [0, 1], sizes = [4, 288], strides = [1, 1]} : vector<4x384xbf16> to vector<4x288xbf16>
    %29 = vector.extract_strided_slice %26 {offsets = [0, 2], sizes = [4, 288], strides = [1, 1]} : vector<4x384xbf16> to vector<4x288xbf16>
    %30 = vector.extract_strided_slice %26 {offsets = [0, 18], sizes = [4, 288], strides = [1, 1]} : vector<4x384xbf16> to vector<4x288xbf16>
    %31 = vector.extract_strided_slice %26 {offsets = [0, 19], sizes = [4, 288], strides = [1, 1]} : vector<4x384xbf16> to vector<4x288xbf16>
    %32 = vector.extract_strided_slice %26 {offsets = [0, 20], sizes = [4, 288], strides = [1, 1]} : vector<4x384xbf16> to vector<4x288xbf16>
    %33 = vector.extract_strided_slice %26 {offsets = [0, 36], sizes = [4, 288], strides = [1, 1]} : vector<4x384xbf16> to vector<4x288xbf16>
    %34 = vector.extract_strided_slice %26 {offsets = [0, 37], sizes = [4, 288], strides = [1, 1]} : vector<4x384xbf16> to vector<4x288xbf16>
    %35 = vector.extract_strided_slice %26 {offsets = [0, 38], sizes = [4, 288], strides = [1, 1]} : vector<4x384xbf16> to vector<4x288xbf16>
    %36 = tpu.concatenate %27, %28, %29, %30, %31, %32, %33, %34, %35 in 0 : vector<4x288xbf16>, vector<4x288xbf16>, vector<4x288xbf16>, vector<4x288xbf16>, vector<4x288xbf16>, vector<4x288xbf16>, vector<4x288xbf16>, vector<4x288xbf16>, vector<4x288xbf16> -> vector<36x288xbf16>
    %cst_10 = arith.constant dense<0.000000e+00> : vector<32x288xf32>
    %37 = tpu.matmul %23, %36, %cst_10 {dimension_numbers = #tpu.dot_dimension_numbers<[1], [0], [0], [1], [0, 0, 1, 1], [], []>} : vector<32x36xbf16>, vector<36x288xbf16>, vector<32x288xf32> -> vector<32x288xf32>
    %38 = vector.broadcast %24 : vector<32x1xf32> to vector<32x288xf32>
    %39 = arith.addf %37, %38 : vector<32x288xf32>
    %cst_11 = arith.constant 0.000000e+00 : f32
    %40 = vector.broadcast %cst_11 : f32 to vector<32x288xf32>
    %41 = arith.maximumf %39, %40 : vector<32x288xf32>
    %cst_12 = arith.constant dense<0.000000e+00> : vector<1x32xf32>
    %42 = tpu.matmul %22, %41, %cst_12 {dimension_numbers = #tpu.dot_dimension_numbers<[1], [1], [0], [0], [0, 0, 1, 0], [], []>} : vector<1x288xf32>, vector<32x288xf32>, vector<1x32xf32> -> vector<1x32xf32>
    %c0_13 = arith.constant 0 : index
    %c1 = arith.constant 1 : index
    %c0_14 = arith.constant 0 : index
    %c0_15 = arith.constant 0 : index
    %43 = vector.load %arg1[%c0_13, %c1, %c0_14, %c0_15] : memref<1x2x4x384xbf16, #tpu.memory_space<vmem>>, vector<1x1x4x384xbf16>
    %44 = vector.shape_cast %43 : vector<1x1x4x384xbf16> to vector<4x384xbf16>
    %45 = vector.extract_strided_slice %44 {offsets = [0, 0], sizes = [4, 288], strides = [1, 1]} : vector<4x384xbf16> to vector<4x288xbf16>
    %46 = vector.extract_strided_slice %44 {offsets = [0, 1], sizes = [4, 288], strides = [1, 1]} : vector<4x384xbf16> to vector<4x288xbf16>
    %47 = vector.extract_strided_slice %44 {offsets = [0, 2], sizes = [4, 288], strides = [1, 1]} : vector<4x384xbf16> to vector<4x288xbf16>
    %48 = vector.extract_strided_slice %44 {offsets = [0, 18], sizes = [4, 288], strides = [1, 1]} : vector<4x384xbf16> to vector<4x288xbf16>
    %49 = vector.extract_strided_slice %44 {offsets = [0, 19], sizes = [4, 288], strides = [1, 1]} : vector<4x384xbf16> to vector<4x288xbf16>
    %50 = vector.extract_strided_slice %44 {offsets = [0, 20], sizes = [4, 288], strides = [1, 1]} : vector<4x384xbf16> to vector<4x288xbf16>
    %51 = vector.extract_strided_slice %44 {offsets = [0, 36], sizes = [4, 288], strides = [1, 1]} : vector<4x384xbf16> to vector<4x288xbf16>
    %52 = vector.extract_strided_slice %44 {offsets = [0, 37], sizes = [4, 288], strides = [1, 1]} : vector<4x384xbf16> to vector<4x288xbf16>
    %53 = vector.extract_strided_slice %44 {offsets = [0, 38], sizes = [4, 288], strides = [1, 1]} : vector<4x384xbf16> to vector<4x288xbf16>
    %54 = tpu.concatenate %45, %46, %47, %48, %49, %50, %51, %52, %53 in 0 : vector<4x288xbf16>, vector<4x288xbf16>, vector<4x288xbf16>, vector<4x288xbf16>, vector<4x288xbf16>, vector<4x288xbf16>, vector<4x288xbf16>, vector<4x288xbf16>, vector<4x288xbf16> -> vector<36x288xbf16>
    %cst_16 = arith.constant dense<0.000000e+00> : vector<32x288xf32>
    %55 = tpu.matmul %23, %54, %cst_16 {dimension_numbers = #tpu.dot_dimension_numbers<[1], [0], [0], [1], [0, 0, 1, 1], [], []>} : vector<32x36xbf16>, vector<36x288xbf16>, vector<32x288xf32> -> vector<32x288xf32>
    %56 = vector.broadcast %24 : vector<32x1xf32> to vector<32x288xf32>
    %57 = arith.addf %55, %56 : vector<32x288xf32>
    %cst_17 = arith.constant 0.000000e+00 : f32
    %58 = vector.broadcast %cst_17 : f32 to vector<32x288xf32>
    %59 = arith.maximumf %57, %58 : vector<32x288xf32>
    %cst_18 = arith.constant dense<0.000000e+00> : vector<1x32xf32>
    %60 = tpu.matmul %22, %59, %cst_18 {dimension_numbers = #tpu.dot_dimension_numbers<[1], [1], [0], [0], [0, 0, 1, 0], [], []>} : vector<1x288xf32>, vector<32x288xf32>, vector<1x32xf32> -> vector<1x32xf32>
    %61 = tpu.concatenate %42, %60 in 1 : vector<1x32xf32>, vector<1x32xf32> -> vector<1x64xf32>
    %62 = arith.truncf %61 : vector<1x64xf32> to vector<1x64xbf16>
    %c0_19 = arith.constant 0 : index
    %c0_20 = arith.constant 0 : index
    %63 = vector.load %arg4[%c0_19, %c0_20] : memref<64x128xbf16, #tpu.memory_space<vmem>>, vector<64x128xbf16>
    %cst_21 = arith.constant dense<0.000000e+00> : vector<1x128xf32>
    %64 = tpu.matmul %62, %63, %cst_21 {dimension_numbers = #tpu.dot_dimension_numbers<[1], [0], [0], [1], [0, 0, 1, 1], [], []>} : vector<1x64xbf16>, vector<64x128xbf16>, vector<1x128xf32> -> vector<1x128xf32>
    %c0_22 = arith.constant 0 : index
    %c0_23 = arith.constant 0 : index
    %65 = vector.load %arg5[%c0_22, %c0_23] : memref<1x128xf32, #tpu.memory_space<vmem>>, vector<1x128xf32>
    %66 = arith.addf %64, %65 : vector<1x128xf32>
    %67 = vector.shape_cast %66 : vector<1x128xf32> to vector<1x1x128xf32>
    %c0_24 = arith.constant 0 : index
    %c0_25 = arith.constant 0 : index
    %c0_26 = arith.constant 0 : index
    %68 = vector.load %arg6[%c0_24, %c0_25, %c0_26] : memref<1x1x128xf32, #tpu.memory_space<vmem>>, vector<1x1x128xf32>
    tpu.vector_store %arg6[%c0_24, %c0_25, %c0_26], %67 {strides = array<i32>} : memref<1x1x128xf32, #tpu.memory_space<vmem>>, vector<1x1x128xf32>,
    return
  }
  func.func @transform_0(%arg0: i32) -> (i32, i32, i32, i32) {
    %c0_i32 = arith.constant 0 : i32
    %c0_i32_0 = arith.constant 0 : i32
    %c0_i32_1 = arith.constant 0 : i32
    %c0_i32_2 = arith.constant 0 : i32
    return %arg0, %c0_i32, %c0_i32_0, %c0_i32_1 : i32, i32, i32, i32
  }
  func.func @transform_1(%arg0: i32) -> (i32, i32) {
    %c0_i32 = arith.constant 0 : i32
    %c0_i32_0 = arith.constant 0 : i32
    %c0_i32_1 = arith.constant 0 : i32
    return %c0_i32, %c0_i32_0 : i32, i32
  }
  func.func @transform_2(%arg0: i32) -> (i32, i32) {
    %c0_i32 = arith.constant 0 : i32
    %c0_i32_0 = arith.constant 0 : i32
    %c0_i32_1 = arith.constant 0 : i32
    return %c0_i32, %c0_i32_0 : i32, i32
  }
  func.func @transform_3(%arg0: i32) -> (i32, i32) {
    %c0_i32 = arith.constant 0 : i32
    %c0_i32_0 = arith.constant 0 : i32
    %c0_i32_1 = arith.constant 0 : i32
    return %c0_i32, %c0_i32_0 : i32, i32
  }
  func.func @transform_4(%arg0: i32) -> (i32, i32) {
    %c0_i32 = arith.constant 0 : i32
    %c0_i32_0 = arith.constant 0 : i32
    %c0_i32_1 = arith.constant 0 : i32
    return %c0_i32, %c0_i32_0 : i32, i32
  }
  func.func @transform_5(%arg0: i32) -> (i32, i32, i32) {
    %c0_i32 = arith.constant 0 : i32
    %c0_i32_0 = arith.constant 0 : i32
    %c0_i32_1 = arith.constant 0 : i32
    return %arg0, %c0_i32, %c0_i32_0 : i32, i32, i32
  }
}

</mosaic_0001>

<llo_original>
// kernel: tpu_custom_call.1
$region0: #{tpu_custom_call.1}
  #allocation0 [shape = 'u32[]', space=smem, size = 0x4, offset = 0x4, fixed_abs, tag = 'smem constant byte address 0x4 - core index']
  #allocation1 [shape = 'u32[72,128]{1,0:T(1,128)}', space=vmem, size = 0x9000, scoped, tag = 'internal scratch']
  %s0 = inlined_call_operand.hbm [shape: bf16[2,2,4,384], index: 0, kind: input, shape index: {}]
  %s1 = inlined_call_operand.hbm [shape: bf16[32,36], index: 1, kind: input, shape index: {}]
  %s2 = inlined_call_operand.vmem [shape: f32[32,1], index: 2, kind: input, shape index: {}]
  %s3 = inlined_call_operand.vmem [shape: bf16[64,128], index: 3, kind: input, shape index: {}]
  %s4 = inlined_call_operand.vmem [shape: f32[1,128], index: 4, kind: input, shape index: {}]
  %s5 = inlined_call_operand.hbm [shape: f32[2,1,128], index: 5, kind: output, shape index: {}]
  %s6 = sld [smem:[#allocation0]]
  $region61: #{tpu_custom_call.1} parent=0
    _
  %s8 = ssub.s32 1, %s6
  %s9 = scalar_select 0, %s8, %s6
  $region1: #{tpu_custom_call.1} parent=0
    #allocation2 [shape = 'u8[12288]{0}', space=vmem, size = 0x3000, scoped, tag = 'input window, operand 0']
    #allocation3 [shape = 's32[2]{0}', space=sflag, size = 0x8, scoped, tag = 'scoped memory for tpu_custom_call.1']
    #allocation4 [shape = 's32[2]{0}', space=sflag, size = 0x8, scoped, tag = 'scoped memory for tpu_custom_call.1']
    #allocation5 [shape = 'u8[8192]{0}', space=vmem, size = 0x2000, scoped, tag = 'input window, operand 1, single buffered']
    #allocation6 [shape = 's32[1]{0}', space=sflag, size = 0x4, scoped, tag = 'scoped memory for tpu_custom_call.1']
    #allocation7 [shape = 'u8[1024]{0}', space=vmem, size = 0x400, scoped, tag = 'output window, operand 0']
    %10 = vsyncpa [#allocation3], 0
    %s11 = scalar_lea.sflag [#allocation3], 1
    %12 = vsyncpa %s11, 0
    %13 = vsyncpa [#allocation6], 0
    %14 = vsyncpa [#allocation4], 0
    %s15 = scalar_lea.sflag [#allocation4], 1
    %16 = vsyncpa %s15, 0
    loop: start=0, step=1, limit=4
    $region2: #{tpu_custom_call.1} parent=1 // loop_pre_header
      _
    $region3: #{tpu_custom_call.1} parent=1 // loop_header
      %s18 = sphi 0, %s22
      %p19 = scmp.ge.s32.totalorder %s18, 4
      %s28 = sphi 0, %s30
      %s31 = sphi 0, %s28
      %s32 = sphi 0, %s31
      %s48 = sphi 0, %s32
      %s52 = sphi 0, %s52
      %s54 = sphi 0, %s52
      %s55 = sphi 0, %s54
      %s69 = sphi 0, %s55
      %s73 = sphi 0, %s73
      %s75 = sphi 0, %s73
      %s76 = sphi 0, %s75
      %s90 = sphi 0, %s76
      %s94 = sphi 0, %s94
      %s96 = sphi 0, %s94
      %s97 = sphi 0, %s96
      %s111 = sphi 0, %s97
      %s115 = sphi 0, %s115
      %s117 = sphi 0, %s115
      %s118 = sphi 0, %s117
      %s132 = sphi 0, %s118
      %s138 = sphi 0, %s140
      %s141 = sphi 0, %s138
      %s142 = sphi 0, %s141
      %s158 = sphi 0, %s142
    $region4: #{tpu_custom_call.1} parent=1 // loop_header_branch
      %21 = sbr.rel (%p19) target = $region8
    $region5: #{tpu_custom_call.1} parent=1 // loop_body
      %s23 = ssub.s32 %s18, 1
      %s24 = ssub.s32 %s18, 2
      %s25 = sadd.s32 %s18, 1
      %s26 = ssub.s32 %s18, %s25
      %p27 = scmp.eq.s32.totalorder %s26, 0
      %s29 = sadd.s32 %s28, 1
      %s30 = scalar_select %p27, %s28, %s29
      %p33 = pneg %p27
      %p34 = scmp.eq.s32.totalorder %s18, 1
      %p35 = por %p33, %p34
      %p36 = scmp.ne.s32.totalorder %s28, %s31
      %p37 = scmp.eq.s32.totalorder %s18, 0
      %p38 = por %p36, %p37
      %p39 = scmp.ne.s32.totalorder %s28, %s31
      %p40 = scmp.eq.s32.totalorder %s23, 1
      %p41 = por %p39, %p40
      %p42 = scmp.ne.s32.totalorder %s31, %s32
      %p43 = scmp.eq.s32.totalorder %s23, 0
      %p44 = por %p42, %p43
      %p45 = scmp.ne.s32.totalorder %s31, %s32
      %p46 = scmp.eq.s32.totalorder %s24, 1
      %p47 = por %p45, %p46
      %p49 = scmp.ne.s32.totalorder %s32, %s48
      %p50 = scmp.eq.s32.totalorder %s24, 0
      %p51 = por %p49, %p50
      %s53 = sadd.s32 %s52, 1
      %p56 = scmp.eq.s32.totalorder %s18, 1
      %p57 = scmp.ne.s32.totalorder %s52, %s54
      %p58 = scmp.eq.s32.totalorder %s18, 0
      %p59 = por %p57, %p58
      %p60 = scmp.ne.s32.totalorder %s52, %s54
      %p61 = scmp.eq.s32.totalorder %s23, 1
      %p62 = por %p60, %p61
      %p63 = scmp.ne.s32.totalorder %s54, %s55
      %p64 = scmp.eq.s32.totalorder %s23, 0
      %p65 = por %p63, %p64
      %p66 = scmp.ne.s32.totalorder %s54, %s55
      %p67 = scmp.eq.s32.totalorder %s24, 1
      %p68 = por %p66, %p67
      %p70 = scmp.ne.s32.totalorder %s55, %s69
      %p71 = scmp.eq.s32.totalorder %s24, 0
      %p72 = por %p70, %p71
      %s74 = sadd.s32 %s73, 1
      %p77 = scmp.eq.s32.totalorder %s18, 1
      %p78 = scmp.ne.s32.totalorder %s73, %s75
      %p79 = scmp.eq.s32.totalorder %s18, 0
      %p80 = por %p78, %p79
      %p81 = scmp.ne.s32.totalorder %s73, %s75
      %p82 = scmp.eq.s32.totalorder %s23, 1
      %p83 = por %p81, %p82
      %p84 = scmp.ne.s32.totalorder %s75, %s76
      %p85 = scmp.eq.s32.totalorder %s23, 0
      %p86 = por %p84, %p85
      %p87 = scmp.ne.s32.totalorder %s75, %s76
      %p88 = scmp.eq.s32.totalorder %s24, 1
      %p89 = por %p87, %p88
      %p91 = scmp.ne.s32.totalorder %s76, %s90
      %p92 = scmp.eq.s32.totalorder %s24, 0
      %p93 = por %p91, %p92
      %s95 = sadd.s32 %s94, 1
      %p98 = scmp.eq.s32.totalorder %s18, 1
      %p99 = scmp.ne.s32.totalorder %s94, %s96
      %p100 = scmp.eq.s32.totalorder %s18, 0
      %p101 = por %p99, %p100
      %p102 = scmp.ne.s32.totalorder %s94, %s96
      %p103 = scmp.eq.s32.totalorder %s23, 1
      %p104 = por %p102, %p103
      %p105 = scmp.ne.s32.totalorder %s96, %s97
      %p106 = scmp.eq.s32.totalorder %s23, 0
      %p107 = por %p105, %p106
      %p108 = scmp.ne.s32.totalorder %s96, %s97
      %p109 = scmp.eq.s32.totalorder %s24, 1
      %p110 = por %p108, %p109
      %p112 = scmp.ne.s32.totalorder %s97, %s111
      %p113 = scmp.eq.s32.totalorder %s24, 0
      %p114 = por %p112, %p113
      %s116 = sadd.s32 %s115, 1
      %p119 = scmp.eq.s32.totalorder %s18, 1
      %p120 = scmp.ne.s32.totalorder %s115, %s117
      %p121 = scmp.eq.s32.totalorder %s18, 0
      %p122 = por %p120, %p121
      %p123 = scmp.ne.s32.totalorder %s115, %s117
      %p124 = scmp.eq.s32.totalorder %s23, 1
      %p125 = por %p123, %p124
      %p126 = scmp.ne.s32.totalorder %s117, %s118
      %p127 = scmp.eq.s32.totalorder %s23, 0
      %p128 = por %p126, %p127
      %p129 = scmp.ne.s32.totalorder %s117, %s118
      %p130 = scmp.eq.s32.totalorder %s24, 1
      %p131 = por %p129, %p130
      %p133 = scmp.ne.s32.totalorder %s118, %s132
      %p134 = scmp.eq.s32.totalorder %s24, 0
      %p135 = por %p133, %p134
      %s136 = ssub.s32 %s18, %s25
      %p137 = scmp.eq.s32.totalorder %s136, 0
      %s139 = sadd.s32 %s138, 1
      %s140 = scalar_select %p137, %s138, %s139
      %p143 = pneg %p137
      %p144 = scmp.eq.s32.totalorder %s18, 1
      %p145 = por %p143, %p144
      %p146 = scmp.ne.s32.totalorder %s138, %s141
      %p147 = scmp.eq.s32.totalorder %s18, 0
      %p148 = por %p146, %p147
      %p149 = scmp.ne.s32.totalorder %s138, %s141
      %p150 = scmp.eq.s32.totalorder %s23, 1
      %p151 = por %p149, %p150
      %p152 = scmp.ne.s32.totalorder %s141, %s142
      %p153 = scmp.eq.s32.totalorder %s23, 0
      %p154 = por %p152, %p153
      %p155 = scmp.ne.s32.totalorder %s141, %s142
      %p156 = scmp.eq.s32.totalorder %s24, 1
      %p157 = por %p155, %p156
      %p159 = scmp.ne.s32.totalorder %s142, %s158
      %p160 = scmp.eq.s32.totalorder %s24, 0
      %p161 = por %p159, %p160
      %p162 = scmp.le.s32.totalorder 1, %s18
      %p163 = scmp.lt.s32.totalorder %s18, 3
      %p164 = pnand %p162, %p163
      %p165 = pneg %p164
      // Predicated region
      $region9: #{tpu_custom_call.1} parent=5 // pred_check
        _
      $region10: #{tpu_custom_call.1} parent=5 // pred_check_branch
        %167 = sbr.rel (%p164) target = $region12
      $region11: #{tpu_custom_call.1} parent=5 // pred_region
        %s168 = ssub.s32 %s18, 1
        // Predicated region
        $region13: #{tpu_custom_call.1} parent=11 // pred_check
          %p169 = pneg %p65
        $region14: #{tpu_custom_call.1} parent=11 // pred_check_branch
          %171 = sbr.rel (%p169) target = $region16
        $region15: #{tpu_custom_call.1} parent=11 // pred_region
          %173 = vsyncadd [#allocation6], 0
          %s174 = sshll.u32 %s1, 4
          %s175 = int_to_ptr.hbm [resolvable:$true] %s174
          %s176 = sshll.u32 [#allocation5], 4
          %s177 = int_to_ptr.vmem [resolvable:$true] %s176
          %182 = dma.hbm_to_vmem [thread:$0]  %s175, 256, %s177, [#allocation6], 64, 64, 4
        $region16: #{tpu_custom_call.1} parent=11 // pred_fallthru
          _
        // Predicated region
        $region17: #{tpu_custom_call.1} parent=11 // pred_check
          %p183 = pneg %p86
        $region18: #{tpu_custom_call.1} parent=11 // pred_check_branch
          %185 = sbr.rel (%p183) target = $region20
        $region19: #{tpu_custom_call.1} parent=11 // pred_region
          _
        $region20: #{tpu_custom_call.1} parent=11 // pred_fallthru
          _
        // Predicated region
        $region21: #{tpu_custom_call.1} parent=11 // pred_check
          %p186 = pneg %p107
        $region22: #{tpu_custom_call.1} parent=11 // pred_check_branch
          %188 = sbr.rel (%p186) target = $region24
        $region23: #{tpu_custom_call.1} parent=11 // pred_region
          _
        $region24: #{tpu_custom_call.1} parent=11 // pred_fallthru
          _
        // Predicated region
        $region25: #{tpu_custom_call.1} parent=11 // pred_check
          %p189 = pneg %p128
        $region26: #{tpu_custom_call.1} parent=11 // pred_check_branch
          %191 = sbr.rel (%p189) target = $region28
        $region27: #{tpu_custom_call.1} parent=11 // pred_region
          _
        $region28: #{tpu_custom_call.1} parent=11 // pred_fallthru
          _
      $region12: #{tpu_custom_call.1} parent=5 // pred_fallthru
        _
      %p192 = scmp.lt.s32.totalorder %s18, 2
      // Predicated region
      $region29: #{tpu_custom_call.1} parent=5 // pred_check
        %p193 = pneg %p192
      $region30: #{tpu_custom_call.1} parent=5 // pred_check_branch
        %195 = sbr.rel (%p193) target = $region32
      $region31: #{tpu_custom_call.1} parent=5 // pred_region
        // Predicated region
        $region33: #{tpu_custom_call.1} parent=31 // pred_check
          %p196 = pneg %p38
        $region34: #{tpu_custom_call.1} parent=31 // pred_check_branch
          %198 = sbr.rel (%p196) target = $region36
        $region35: #{tpu_custom_call.1} parent=31 // pred_region
          %s199 = sand.u32 %s28, 1
          %s200 = scalar_lea.sflag [#allocation3], %s199
          %s201 = sand.u32 %s28, 1
          %s202 = smul.addr %s201, 12
          %s203 = scalar_lea.vmem [#allocation2], %s202
          %205 = vsyncadd %s200, 0
          %s206 = smul.addr %s18, 6
          %s207 = smul.addr %s206, 2
          %s208 = scalar_lea.hbm %s0, %s207
          %s209 = sshll.u32 %s208, 4
          %s210 = int_to_ptr.hbm [resolvable:$true] %s209
          %s211 = sshll.u32 %s203, 4
          %s212 = int_to_ptr.vmem [resolvable:$true] %s211
          %217 = dma.hbm_to_vmem [thread:$0]  %s210, 192, %s212, %s200, 96, 96, 6
        $region36: #{tpu_custom_call.1} parent=31 // pred_fallthru
          _
      $region32: #{tpu_custom_call.1} parent=5 // pred_fallthru
        _
      %p218 = scmp.le.s32.totalorder 1, %s18
      %p219 = scmp.lt.s32.totalorder %s18, 3
      %p220 = pnand %p218, %p219
      %p221 = pneg %p220
      // Predicated region
      $region37: #{tpu_custom_call.1} parent=5 // pred_check
        _
      $region38: #{tpu_custom_call.1} parent=5 // pred_check_branch
        %223 = sbr.rel (%p220) target = $region40
      $region39: #{tpu_custom_call.1} parent=5 // pred_region
        %s224 = ssub.s32 %s18, 1
        %s225 = sand.u32 %s31, 1
        %s226 = scalar_lea.sflag [#allocation3], %s225
        %s227 = sand.u32 %s31, 1
        %s228 = smul.addr %s227, 12
        %s229 = scalar_lea.vmem [#allocation2], %s228
        // Predicated region
        $region41: #{tpu_custom_call.1} parent=39 // pred_check
          %p230 = pneg %p44
        $region42: #{tpu_custom_call.1} parent=39 // pred_check_branch
          %232 = sbr.rel (%p230) target = $region44
        $region43: #{tpu_custom_call.1} parent=39 // pred_region
          %234 = dma.done %s226, 192
        $region44: #{tpu_custom_call.1} parent=39 // pred_fallthru
          _
        // Predicated region
        $region45: #{tpu_custom_call.1} parent=39 // pred_check
          %p235 = pneg %p65
        $region46: #{tpu_custom_call.1} parent=39 // pred_check_branch
          %237 = sbr.rel (%p235) target = $region48
        $region47: #{tpu_custom_call.1} parent=39 // pred_region
          %239 = dma.done [#allocation6], 256
        $region48: #{tpu_custom_call.1} parent=39 // pred_fallthru
          _
        %s240 = sand.u32 %s31, 1
        %s241 = scalar_lea.sflag [#allocation3], %s240
        %s242 = sand.u32 %s31, 1
        %s243 = smul.addr %s242, 12
        %s244 = scalar_lea.vmem [#allocation2], %s243
        %p245 = pneg %p44
        %p246 = pneg %p41
        %p247 = pneg %p65
        %p248 = pneg %p62
        %p249 = pneg %p86
        %p250 = pneg %p83
        %p251 = pneg %p107
        %p252 = pneg %p104
        %p253 = pneg %p128
        %p254 = pneg %p125
        %p255 = pneg %p154
        %p256 = pneg %p151
        %s257 = sand.u32 %s141, 1
        %s258 = scalar_lea.sflag [#allocation4], %s257
        %s259 = sand.u32 %s141, 1
        %s260 = scalar_lea.vmem [#allocation7], %s259
        %v262 = vlaneseq
        %v263 = vand.u32 %v262, 127
        %v264 = vadd.s32 %v263, 128
        %v265 = vadd.s32 %v263, 256
        %vm266 = vcmp.lt.s32.totalorder %v263, 0
        %v267 = vsub.s32 0, %v263
        %v268 = vsel %vm266, %v267, %v263
        %v269 = vand.u32 %v268, 65535
        %v270 = vshrl.u32 %v268, 16
        %v272 = vmul.u32 %v269, 14564
        %v273 = vmul.u32 %v269, 58254
        %v274 = vmul.u32 %v270, 14564
        %v275 = vmul.u32 %v270, 58254
        %v276 = vshll.u32 %v273, 16
        %v277 = vshrl.u32 %v273, 16
        %v278 = vshll.u32 %v274, 16
        %v279 = vshrl.u32 %v274, 16
        %vm280 = vc.u32 %v272, %v276
        %v281 = vsel %vm280, 1, 0
        %v282 = vadd.s32 %v272, %v276
        %v283 = vadd.s32 %v275, %v281
        %vm284 = vc.u32 %v282, %v278
        %v285 = vsel %vm284, 1, 0
        %v286 = vadd.s32 %v282, %v278
        %v287 = vadd.s32 %v283, %v285
        %v288 = vadd.s32 %v287, %v277
        %v289 = vadd.s32 %v288, %v279
        %v290 = vshrl.u32 %v289, 4
        %v291 = vmul.u32 %v290, 18
        %v292 = vsub.s32 %v268, %v291
        %v293 = vsub.s32 0, %v292
        %v294 = vsel %vm266, %v293, %v292
        %vm295 = vcmp.lt.s32.totalorder %v264, 0
        %v296 = vsub.s32 0, %v264
        %v297 = vsel %vm295, %v296, %v264
        %v298 = vand.u32 %v297, 65535
        %v299 = vshrl.u32 %v297, 16
        %v301 = vmul.u32 %v298, 14564
        %v302 = vmul.u32 %v298, 58254
        %v303 = vmul.u32 %v299, 14564
        %v304 = vmul.u32 %v299, 58254
        %v305 = vshll.u32 %v302, 16
        %v306 = vshrl.u32 %v302, 16
        %v307 = vshll.u32 %v303, 16
        %v308 = vshrl.u32 %v303, 16
        %vm309 = vc.u32 %v301, %v305
        %v310 = vsel %vm309, 1, 0
        %v311 = vadd.s32 %v301, %v305
        %v312 = vadd.s32 %v304, %v310
        %vm313 = vc.u32 %v311, %v307
        %v314 = vsel %vm313, 1, 0
        %v315 = vadd.s32 %v311, %v307
        %v316 = vadd.s32 %v312, %v314
        %v317 = vadd.s32 %v316, %v306
        %v318 = vadd.s32 %v317, %v308
        %v319 = vshrl.u32 %v318, 4
        %v320 = vmul.u32 %v319, 18
        %v321 = vsub.s32 %v297, %v320
        %v322 = vsub.s32 0, %v321
        %v323 = vsel %vm295, %v322, %v321
        %vm324 = vcmp.lt.s32.totalorder %v265, 0
        %v325 = vsub.s32 0, %v265
        %v326 = vsel %vm324, %v325, %v265
        %v327 = vand.u32 %v326, 65535
        %v328 = vshrl.u32 %v326, 16
        %v330 = vmul.u32 %v327, 14564
        %v331 = vmul.u32 %v327, 58254
        %v332 = vmul.u32 %v328, 14564
        %v333 = vmul.u32 %v328, 58254
        %v334 = vshll.u32 %v331, 16
        %v335 = vshrl.u32 %v331, 16
        %v336 = vshll.u32 %v332, 16
        %v337 = vshrl.u32 %v332, 16
        %vm338 = vc.u32 %v330, %v334
        %v339 = vsel %vm338, 1, 0
        %v340 = vadd.s32 %v330, %v334
        %v341 = vadd.s32 %v333, %v339
        %vm342 = vc.u32 %v340, %v336
        %v343 = vsel %vm342, 1, 0
        %v344 = vadd.s32 %v340, %v336
        %v345 = vadd.s32 %v341, %v343
        %v346 = vadd.s32 %v345, %v335
        %v347 = vadd.s32 %v346, %v337
        %v348 = vshrl.u32 %v347, 4
        %v349 = vmul.u32 %v348, 18
        %v350 = vsub.s32 %v326, %v349
        %v351 = vsub.s32 0, %v350
        %v352 = vsel %vm324, %v351, %v350
        %vm353 = vcmp.ne.s32.totalorder %v294, 0
        %vm354 = vcmp.ne.s32.totalorder %v323, 0
        %vm355 = vcmp.ne.s32.totalorder %v352, 0
        %vm356 = vcmp.lt.s32.totalorder %v294, 0
        %vm357 = vcmp.lt.s32.totalorder %v323, 0
        %vm358 = vcmp.lt.s32.totalorder %v352, 0
        %vm359 = vmand %vm356, %vm353
        %vm360 = vmand %vm357, %vm354
        %vm361 = vmand %vm358, %vm355
        %v362 = vadd.s32 %v294, 18
        %v363 = vadd.s32 %v323, 18
        %v364 = vadd.s32 %v352, 18
        %v365 = vsel %vm359, %v362, %v294
        %v366 = vsel %vm360, %v363, %v323
        %v367 = vsel %vm361, %v364, %v352
        %vm368 = vcmp.lt.s32.totalorder %v365, 16
        %vm369 = vcmp.lt.s32.totalorder %v366, 16
        %vm370 = vcmp.lt.s32.totalorder %v367, 16
        %v371 = vsel %vm368, 1, 0
        %v372 = vsel %vm369, 1, 0
        %v373 = vsel %vm370, 1, 0
        %v374 = vcvt.s32.f32 %v371
        %v375 = vcvt.s32.f32 %v372
        %v376 = vcvt.s32.f32 %v373
        %v377 = vmul.f32 %v374, 0.00390625
        %v378 = vmul.f32 %v375, 0.00390625
        %v379 = vmul.f32 %v376, 0.00390625
        %v380 = vld [vmem:[#allocation5] sm:$0xf]
        %v381 = vld [vmem:[#allocation5 + $0x4] sm:$0xf]
        %v382 = vld [vmem:[#allocation5 + $0x8] sm:$0xf]
        %v383 = vld [vmem:[#allocation5 + $0xc] sm:$0xf]
        %v384 = vld [vmem:[%s2] sm:$0xff]
        %v385 = vld [vmem:[%s2 + $0x8] sm:$0xff]
        %v386 = vld [vmem:[%s2 + $0x10] sm:$0xff]
        %v387 = vld [vmem:[%s2 + $0x18] sm:$0xff]
        %v388 = vld [vmem:[%s229] sm:$0x3f]
        %390 = vst [vmem:[#allocation1] ss:$4 sm:$0xff] %v388
        %v391 = vld.sshfl [vmem:[#allocation1] sm:$0xff pattern:$0x73625140]
        %v392 = vld.sshfl [vmem:[#allocation1 + $0x8] sm:$0xff pattern:$0x73625140]
        %v393 = vld.sshfl [vmem:[#allocation1 + $0x10] sm:$0xff pattern:$0x73625140]
        %s394 = scalar_lea.vmem [#allocation1], 1
        %395 = vst [vmem:[%s394] ss:$4 sm:$0xff] %v388
        %v396 = vld.sshfl [vmem:[#allocation1] sm:$0xff pattern:$0x73625140]
        %v398 = vld.sshfl [vmem:[#allocation1 + $0x8] sm:$0xff pattern:$0x73625140]
        %v400 = vld.sshfl [vmem:[#allocation1 + $0x10] sm:$0xff pattern:$0x73625140]
        %402 = vrot.lane.b32.xlu0 %v396, 127
        %v403 = vpop.permute.xlu0 %402
        %404 = vrot.lane.b32.xlu0 %v398, 127
        %v405 = vpop.permute.xlu0 %404
        %406 = vrot.lane.b32.xlu0 %v400, 127
        %v407 = vpop.permute.xlu0 %406
        %vm408 = vcmask 1039360
        %v409 = vsel %vm408, %v403, %v405
        %v410 = vsel %vm408, %v405, %v407
        %s411 = scalar_lea.vmem [#allocation1], 2
        %412 = vst [vmem:[%s411] ss:$4 sm:$0xff] %v388
        %v413 = vld.sshfl [vmem:[#allocation1] sm:$0xff pattern:$0x73625140]
        %v415 = vld.sshfl [vmem:[#allocation1 + $0x8] sm:$0xff pattern:$0x73625140]
        %v417 = vld.sshfl [vmem:[#allocation1 + $0x10] sm:$0xff pattern:$0x73625140]
        %419 = vrot.lane.b32.xlu0 %v413, 126
        %v420 = vpop.permute.xlu0 %419
        %421 = vrot.lane.b32.xlu0 %v415, 126
        %v422 = vpop.permute.xlu0 %421
        %423 = vrot.lane.b32.xlu0 %v417, 126
        %v424 = vpop.permute.xlu0 %423
        %vm425 = vcmask 1031168
        %v426 = vsel %vm425, %v420, %v422
        %v427 = vsel %vm425, %v422, %v424
        %s428 = scalar_lea.vmem [#allocation1], 3
        %429 = vst [vmem:[%s428] ss:$4 sm:$0xff] %v388
        %v430 = vld.sshfl [vmem:[#allocation1] sm:$0xff pattern:$0x73625140]
        %v432 = vld.sshfl [vmem:[#allocation1 + $0x8] sm:$0xff pattern:$0x73625140]
        %v434 = vld.sshfl [vmem:[#allocation1 + $0x10] sm:$0xff pattern:$0x73625140]
        %436 = vrot.lane.b32.xlu0 %v430, 110
        %v437 = vpop.permute.xlu0 %436
        %438 = vrot.lane.b32.xlu0 %v432, 110
        %v439 = vpop.permute.xlu0 %438
        %440 = vrot.lane.b32.xlu0 %v434, 110
        %v441 = vpop.permute.xlu0 %440
        %vm442 = vcmask 900096
        %v443 = vsel %vm442, %v437, %v439
        %v444 = vsel %vm442, %v439, %v441
        %445 = vst [vmem:[#allocation1] ss:$4 sm:$0xff] %v388
        %v446 = vld.sshfl [vmem:[#allocation1] sm:$0xff pattern:$0x73625140]
        %v448 = vld.sshfl [vmem:[#allocation1 + $0x8] sm:$0xff pattern:$0x73625140]
        %v450 = vld.sshfl [vmem:[#allocation1 + $0x10] sm:$0xff pattern:$0x73625140]
        %452 = vrot.lane.b32.xlu0 %v446, 109
        %v453 = vpop.permute.xlu0 %452
        %454 = vrot.lane.b32.xlu0 %v448, 109
        %v455 = vpop.permute.xlu0 %454
        %456 = vrot.lane.b32.xlu0 %v450, 109
        %v457 = vpop.permute.xlu0 %456
        %vm458 = vcmask 891904
        %v459 = vsel %vm458, %v453, %v455
        %v460 = vsel %vm458, %v455, %v457
        %s461 = scalar_lea.vmem [#allocation1], 1
        %462 = vst [vmem:[%s461] ss:$4 sm:$0xff] %v388
        %v463 = vld.sshfl [vmem:[#allocation1] sm:$0xff pattern:$0x73625140]
        %v465 = vld.sshfl [vmem:[#allocation1 + $0x8] sm:$0xff pattern:$0x73625140]
        %v467 = vld.sshfl [vmem:[#allocation1 + $0x10] sm:$0xff pattern:$0x73625140]
        %469 = vrot.lane.b32.xlu0 %v463, 108
        %v470 = vpop.permute.xlu0 %469
        %471 = vrot.lane.b32.xlu0 %v465, 108
        %v472 = vpop.permute.xlu0 %471
        %473 = vrot.lane.b32.xlu0 %v467, 108
        %v474 = vpop.permute.xlu0 %473
        %vm475 = vcmask 883712
        %v476 = vsel %vm475, %v470, %v472
        %v477 = vsel %vm475, %v472, %v474
        %s478 = scalar_lea.vmem [#allocation1], 2
        %479 = vst [vmem:[%s478] ss:$4 sm:$0xff] %v388
        %v480 = vld.sshfl [vmem:[#allocation1] sm:$0xff pattern:$0x73625140]
        %v482 = vld.sshfl [vmem:[#allocation1 + $0x8] sm:$0xff pattern:$0x73625140]
        %v484 = vld.sshfl [vmem:[#allocation1 + $0x10] sm:$0xff pattern:$0x73625140]
        %486 = vrot.lane.b32.xlu0 %v480, 92
        %v487 = vpop.permute.xlu0 %486
        %488 = vrot.lane.b32.xlu0 %v482, 92
        %v489 = vpop.permute.xlu0 %488
        %490 = vrot.lane.b32.xlu0 %v484, 92
        %v491 = vpop.permute.xlu0 %490
        %vm492 = vcmask 752640
        %v493 = vsel %vm492, %v487, %v489
        %v494 = vsel %vm492, %v489, %v491
        %s495 = scalar_lea.vmem [#allocation1], 3
        %496 = vst [vmem:[%s495] ss:$4 sm:$0xff] %v388
        %v497 = vld.sshfl [vmem:[#allocation1] sm:$0xff pattern:$0x73625140]
        %v499 = vld.sshfl [vmem:[#allocation1 + $0x8] sm:$0xff pattern:$0x73625140]
        %v501 = vld.sshfl [vmem:[#allocation1 + $0x10] sm:$0xff pattern:$0x73625140]
        %503 = vrot.lane.b32.xlu0 %v497, 91
        %v504 = vpop.permute.xlu0 %503
        %505 = vrot.lane.b32.xlu0 %v499, 91
        %v506 = vpop.permute.xlu0 %505
        %507 = vrot.lane.b32.xlu0 %v501, 91
        %v508 = vpop.permute.xlu0 %507
        %vm509 = vcmask 744448
        %v510 = vsel %vm509, %v504, %v506
        %v511 = vsel %vm509, %v506, %v508
        %512 = vst [vmem:[#allocation1] ss:$4 sm:$0xff] %v388
        %v513 = vld.sshfl [vmem:[#allocation1] sm:$0xff pattern:$0x73625140]
        %v515 = vld.sshfl [vmem:[#allocation1 + $0x8] sm:$0xff pattern:$0x73625140]
        %v517 = vld.sshfl [vmem:[#allocation1 + $0x10] sm:$0xff pattern:$0x73625140]
        %519 = vrot.lane.b32.xlu0 %v513, 90
        %v520 = vpop.permute.xlu0 %519
        %521 = vrot.lane.b32.xlu0 %v515, 90
        %v522 = vpop.permute.xlu0 %521
        %523 = vrot.lane.b32.xlu0 %v517, 90
        %v524 = vpop.permute.xlu0 %523
        %vm525 = vcmask 736256
        %v526 = vsel %vm525, %v520, %v522
        %v527 = vsel %vm525, %v522, %v524
        %vm528 = vcmask 1041408
        %v530 = vsel %vm528, %v391, %v409
        %v532 = vsel %vm528, %v392, %v410
        %v534 = vsel %vm528, %v393, %v407
        %vm535 = vcmask 1043456
        %v537 = vsel %vm535, %v530, %v426
        %v539 = vsel %vm535, %v532, %v427
        %v541 = vsel %vm535, %v534, %v424
        %vm542 = vcmask 1045504
        %v544 = vsel %vm542, %v537, %v443
        %v547 = vsel %vm542, %v539, %v444
        %v550 = vsel %vm542, %v541, %v441
        %v554 = vsel %vm528, %v459, %v476
        %v557 = vsel %vm528, %v460, %v477
        %v560 = vsel %vm528, %v457, %v474
        %v562 = vsel %vm535, %v554, %v493
        %v564 = vsel %vm535, %v557, %v494
        %v566 = vsel %vm535, %v560, %v491
        %v568 = vsel %vm542, %v562, %v510
        %v571 = vsel %vm542, %v564, %v511
        %v574 = vsel %vm542, %v566, %v508
        %577 = vset.pattern.permute.xlu0 0
        %578 = vperm.xlu0 %577, %v384
        %v579 = vpop.permute.xlu0 %578
        %582 = vset.pattern.permute.xlu0 0
        %583 = vperm.xlu0 %582, %v385
        %v584 = vpop.permute.xlu0 %583
        %587 = vset.pattern.permute.xlu0 0
        %588 = vperm.xlu0 %587, %v386
        %v589 = vpop.permute.xlu0 %588
        %592 = vset.pattern.permute.xlu0 0
        %593 = vperm.xlu0 %592, %v387
        %v594 = vpop.permute.xlu0 %593
        %v600 = vunpack.c.l.b16 %v380
        %v601 = vunpack.c.l.b16 %v381
        %v602 = vunpack.c.l.b16 %v382
        %v603 = vunpack.c.l.b16 %v383
        %v604 = vpack.c.b16 %v601, %v600
        %v605 = vpack.c.b16 %v603, %v602
        %vm606 = vcmask 293888
        %v608 = vsel %vm606, %v604, 0
        %v611 = vsel %vm606, %v605, 0
        %v614 = vsel %vm528, %v526, 0
        %v617 = vsel %vm528, %v527, 0
        %v620 = vsel %vm528, %v524, 0
        %622 = vmatpush.bf16.msra.mxu0 0
        %623 = vmatpush.bf16.msra.mxu0 0
        %624 = vmatpush.bf16.msra.mxu0 0
        %625 = vmatpush.bf16.msra.mxu0 0
        %626 = vmatpush.bf16.msra.mxu0 0
        %627 = vmatpush.bf16.msra.mxu0 %v614
        %628 = vmatpush.bf16.msra.mxu0 %v568
        %629 = vmatpush.bf16.msra.mxu0 %v544
        %630 = vmatmul.bf16.gmra.mxu0 %v608
        %v631 = vpop.f32.mrf.mxu0
        %v632 = vadd.f32 %v579, %v631
        %v633 = vpop.f32.mrf.mxu0
        %v634 = vadd.f32 %v584, %v633
        %635 = vmatmul.bf16.gmra.mxu0 %v611
        %v636 = vpop.f32.mrf.mxu0
        %v637 = vadd.f32 %v589, %v636
        %v638 = vpop.f32.mrf.mxu0
        %v639 = vadd.f32 %v594, %v638
        %640 = vdwg.mxu0
        %641 = vmatpush.bf16.msra.mxu0 0
        %642 = vmatpush.bf16.msra.mxu0 0
        %643 = vmatpush.bf16.msra.mxu0 0
        %644 = vmatpush.bf16.msra.mxu0 0
        %645 = vmatpush.bf16.msra.mxu0 0
        %646 = vmatpush.bf16.msra.mxu0 %v617
        %647 = vmatpush.bf16.msra.mxu0 %v571
        %648 = vmatpush.bf16.msra.mxu0 %v547
        %649 = vmatmul.bf16.gmra.mxu0 %v608
        %v650 = vpop.f32.mrf.mxu0
        %v651 = vadd.f32 %v579, %v650
        %v652 = vpop.f32.mrf.mxu0
        %v653 = vadd.f32 %v584, %v652
        %654 = vmatmul.bf16.gmra.mxu0 %v611
        %v655 = vpop.f32.mrf.mxu0
        %v656 = vadd.f32 %v589, %v655
        %v657 = vpop.f32.mrf.mxu0
        %v658 = vadd.f32 %v594, %v657
        %659 = vdwg.mxu0
        %660 = vmatpush.bf16.msra.mxu0 0
        %661 = vmatpush.bf16.msra.mxu0 0
        %662 = vmatpush.bf16.msra.mxu0 0
        %663 = vmatpush.bf16.msra.mxu0 0
        %664 = vmatpush.bf16.msra.mxu0 0
        %665 = vmatpush.bf16.msra.mxu0 %v620
        %666 = vmatpush.bf16.msra.mxu0 %v574
        %667 = vmatpush.bf16.msra.mxu0 %v550
        %668 = vmatmul.bf16.gmra.mxu0 %v608
        %v669 = vpop.f32.mrf.mxu0
        %v670 = vadd.f32 %v579, %v669
        %v671 = vpop.f32.mrf.mxu0
        %v672 = vadd.f32 %v584, %v671
        %673 = vmatmul.bf16.gmra.mxu0 %v611
        %v674 = vpop.f32.mrf.mxu0
        %v675 = vadd.f32 %v589, %v674
        %v676 = vpop.f32.mrf.mxu0
        %v677 = vadd.f32 %v594, %v676
        %678 = vdwg.mxu0
        %v679 = vmax.f32 %v632, 0.0
        %v680 = vmax.f32 %v651, 0.0
        %v681 = vmax.f32 %v670, 0.0
        %v682 = vmax.f32 %v634, 0.0
        %v683 = vmax.f32 %v653, 0.0
        %v684 = vmax.f32 %v672, 0.0
        %v685 = vmax.f32 %v637, 0.0
        %v686 = vmax.f32 %v656, 0.0
        %v687 = vmax.f32 %v675, 0.0
        %v688 = vmax.f32 %v639, 0.0
        %v689 = vmax.f32 %v658, 0.0
        %v690 = vmax.f32 %v677, 0.0
        %vm691 = vcmask 261120
        %v693 = vsel %vm691, %v379, 0
        %v696 = vsel %vm691, %v681, 0
        %v699 = vsel %vm691, %v684, 0
        %v702 = vsel %vm691, %v687, 0
        %v705 = vsel %vm691, %v690, 0
        %707 = vmatpush.xpose.msra.mxu0 0.0
        %708 = vmatpush.xpose.msra.mxu0 0.0
        %709 = vmatpush.xpose.msra.mxu0 0.0
        %710 = vmatpush.xpose.msra.mxu0 0.0
        %711 = vmatpush.xpose.msra.mxu0 0.0
        %712 = vmatpush.xpose.msra.mxu0 0.0
        %713 = vmatpush.xpose.msra.mxu0 0.0
        %714 = vmatpush.xpose.msra.mxu0 0.0
        %715 = vmatpush.xpose.msra.mxu0 0.0
        %716 = vmatpush.xpose.msra.mxu0 0.0
        %717 = vmatpush.xpose.msra.mxu0 0.0
        %718 = vmatpush.xpose.msra.mxu0 0.0
        %719 = vmatpush.xpose.msra.mxu0 %v688
        %720 = vmatpush.xpose.msra.mxu0 %v685
        %721 = vmatpush.xpose.msra.mxu0 %v682
        %722 = vmatpush.xpose.msra.mxu0 %v679
        %723 = vmatmul.f32.gmra.mxu0 %v377
        %v724 = vpop.f32.mrf.mxu0
        %v725 = vadd.f32 0.0, %v724
        %726 = vdwg.mxu0
        %727 = vmatpush.xpose.msra.mxu0 0.0
        %728 = vmatpush.xpose.msra.mxu0 0.0
        %729 = vmatpush.xpose.msra.mxu0 0.0
        %730 = vmatpush.xpose.msra.mxu0 0.0
        %731 = vmatpush.xpose.msra.mxu0 0.0
        %732 = vmatpush.xpose.msra.mxu0 0.0
        %733 = vmatpush.xpose.msra.mxu0 0.0
        %734 = vmatpush.xpose.msra.mxu0 0.0
        %735 = vmatpush.xpose.msra.mxu0 0.0
        %736 = vmatpush.xpose.msra.mxu0 0.0
        %737 = vmatpush.xpose.msra.mxu0 0.0
        %738 = vmatpush.xpose.msra.mxu0 0.0
        %739 = vmatpush.xpose.msra.mxu0 %v689
        %740 = vmatpush.xpose.msra.mxu0 %v686
        %741 = vmatpush.xpose.msra.mxu0 %v683
        %742 = vmatpush.xpose.msra.mxu0 %v680
        %743 = vmatmul.f32.gmra.mxu0 %v378
        %v744 = vpop.f32.mrf.mxu0
        %v745 = vadd.f32 %v725, %v744
        %746 = vdwg.mxu0
        %747 = vmatpush.xpose.msra.mxu0 0.0
        %748 = vmatpush.xpose.msra.mxu0 0.0
        %749 = vmatpush.xpose.msra.mxu0 0.0
        %750 = vmatpush.xpose.msra.mxu0 0.0
        %751 = vmatpush.xpose.msra.mxu0 0.0
        %752 = vmatpush.xpose.msra.mxu0 0.0
        %753 = vmatpush.xpose.msra.mxu0 0.0
        %754 = vmatpush.xpose.msra.mxu0 0.0
        %755 = vmatpush.xpose.msra.mxu0 0.0
        %756 = vmatpush.xpose.msra.mxu0 0.0
        %757 = vmatpush.xpose.msra.mxu0 0.0
        %758 = vmatpush.xpose.msra.mxu0 0.0
        %759 = vmatpush.xpose.msra.mxu0 %v705
        %760 = vmatpush.xpose.msra.mxu0 %v702
        %761 = vmatpush.xpose.msra.mxu0 %v699
        %762 = vmatpush.xpose.msra.mxu0 %v696
        %763 = vmatmul.f32.gmra.mxu0 %v693
        %v764 = vpop.f32.mrf.mxu0
        %v765 = vadd.f32 %v745, %v764
        %766 = vdwg.mxu0
        %s767 = scalar_lea.vmem %s229, 6 [#allocation2]
        %v768 = vld [vmem:[%s767] sm:$0x3f]
        %770 = vst [vmem:[#allocation1] ss:$4 sm:$0xff] %v768
        %v771 = vld.sshfl [vmem:[#allocation1] sm:$0xff pattern:$0x73625140]
        %v772 = vld.sshfl [vmem:[#allocation1 + $0x8] sm:$0xff pattern:$0x73625140]
        %v773 = vld.sshfl [vmem:[#allocation1 + $0x10] sm:$0xff pattern:$0x73625140]
        %s774 = scalar_lea.vmem [#allocation1], 1
        %775 = vst [vmem:[%s774] ss:$4 sm:$0xff] %v768
        %v776 = vld.sshfl [vmem:[#allocation1] sm:$0xff pattern:$0x73625140]
        %v778 = vld.sshfl [vmem:[#allocation1 + $0x8] sm:$0xff pattern:$0x73625140]
        %v780 = vld.sshfl [vmem:[#allocation1 + $0x10] sm:$0xff pattern:$0x73625140]
        %782 = vrot.lane.b32.xlu0 %v776, 127
        %v783 = vpop.permute.xlu0 %782
        %784 = vrot.lane.b32.xlu0 %v778, 127
        %v785 = vpop.permute.xlu0 %784
        %786 = vrot.lane.b32.xlu0 %v780, 127
        %v787 = vpop.permute.xlu0 %786
        %v788 = vsel %vm408, %v783, %v785
        %v789 = vsel %vm408, %v785, %v787
        %s790 = scalar_lea.vmem [#allocation1], 2
        %791 = vst [vmem:[%s790] ss:$4 sm:$0xff] %v768
        %v792 = vld.sshfl [vmem:[#allocation1] sm:$0xff pattern:$0x73625140]
        %v794 = vld.sshfl [vmem:[#allocation1 + $0x8] sm:$0xff pattern:$0x73625140]
        %v796 = vld.sshfl [vmem:[#allocation1 + $0x10] sm:$0xff pattern:$0x73625140]
        %798 = vrot.lane.b32.xlu0 %v792, 126
        %v799 = vpop.permute.xlu0 %798
        %800 = vrot.lane.b32.xlu0 %v794, 126
        %v801 = vpop.permute.xlu0 %800
        %802 = vrot.lane.b32.xlu0 %v796, 126
        %v803 = vpop.permute.xlu0 %802
        %v804 = vsel %vm425, %v799, %v801
        %v805 = vsel %vm425, %v801, %v803
        %s806 = scalar_lea.vmem [#allocation1], 3
        %807 = vst [vmem:[%s806] ss:$4 sm:$0xff] %v768
        %v808 = vld.sshfl [vmem:[#allocation1] sm:$0xff pattern:$0x73625140]
        %v810 = vld.sshfl [vmem:[#allocation1 + $0x8] sm:$0xff pattern:$0x73625140]
        %v812 = vld.sshfl [vmem:[#allocation1 + $0x10] sm:$0xff pattern:$0x73625140]
        %814 = vrot.lane.b32.xlu0 %v808, 110
        %v815 = vpop.permute.xlu0 %814
        %816 = vrot.lane.b32.xlu0 %v810, 110
        %v817 = vpop.permute.xlu0 %816
        %818 = vrot.lane.b32.xlu0 %v812, 110
        %v819 = vpop.permute.xlu0 %818
        %v820 = vsel %vm442, %v815, %v817
        %v821 = vsel %vm442, %v817, %v819
        %822 = vst [vmem:[#allocation1] ss:$4 sm:$0xff] %v768
        %v823 = vld.sshfl [vmem:[#allocation1] sm:$0xff pattern:$0x73625140]
        %v825 = vld.sshfl [vmem:[#allocation1 + $0x8] sm:$0xff pattern:$0x73625140]
        %v827 = vld.sshfl [vmem:[#allocation1 + $0x10] sm:$0xff pattern:$0x73625140]
        %829 = vrot.lane.b32.xlu0 %v823, 109
        %v830 = vpop.permute.xlu0 %829
        %831 = vrot.lane.b32.xlu0 %v825, 109
        %v832 = vpop.permute.xlu0 %831
        %833 = vrot.lane.b32.xlu0 %v827, 109
        %v834 = vpop.permute.xlu0 %833
        %v835 = vsel %vm458, %v830, %v832
        %v836 = vsel %vm458, %v832, %v834
        %s837 = scalar_lea.vmem [#allocation1], 1
        %838 = vst [vmem:[%s837] ss:$4 sm:$0xff] %v768
        %v839 = vld.sshfl [vmem:[#allocation1] sm:$0xff pattern:$0x73625140]
        %v841 = vld.sshfl [vmem:[#allocation1 + $0x8] sm:$0xff pattern:$0x73625140]
        %v843 = vld.sshfl [vmem:[#allocation1 + $0x10] sm:$0xff pattern:$0x73625140]
        %845 = vrot.lane.b32.xlu0 %v839, 108
        %v846 = vpop.permute.xlu0 %845
        %847 = vrot.lane.b32.xlu0 %v841, 108
        %v848 = vpop.permute.xlu0 %847
        %849 = vrot.lane.b32.xlu0 %v843, 108
        %v850 = vpop.permute.xlu0 %849
        %v851 = vsel %vm475, %v846, %v848
        %v852 = vsel %vm475, %v848, %v850
        %s853 = scalar_lea.vmem [#allocation1], 2
        %854 = vst [vmem:[%s853] ss:$4 sm:$0xff] %v768
        %v855 = vld.sshfl [vmem:[#allocation1] sm:$0xff pattern:$0x73625140]
        %v857 = vld.sshfl [vmem:[#allocation1 + $0x8] sm:$0xff pattern:$0x73625140]
        %v859 = vld.sshfl [vmem:[#allocation1 + $0x10] sm:$0xff pattern:$0x73625140]
        %861 = vrot.lane.b32.xlu0 %v855, 92
        %v862 = vpop.permute.xlu0 %861
        %863 = vrot.lane.b32.xlu0 %v857, 92
        %v864 = vpop.permute.xlu0 %863
        %865 = vrot.lane.b32.xlu0 %v859, 92
        %v866 = vpop.permute.xlu0 %865
        %v867 = vsel %vm492, %v862, %v864
        %v868 = vsel %vm492, %v864, %v866
        %s869 = scalar_lea.vmem [#allocation1], 3
        %870 = vst [vmem:[%s869] ss:$4 sm:$0xff] %v768
        %v871 = vld.sshfl [vmem:[#allocation1] sm:$0xff pattern:$0x73625140]
        %v873 = vld.sshfl [vmem:[#allocation1 + $0x8] sm:$0xff pattern:$0x73625140]
        %v875 = vld.sshfl [vmem:[#allocation1 + $0x10] sm:$0xff pattern:$0x73625140]
        %877 = vrot.lane.b32.xlu0 %v871, 91
        %v878 = vpop.permute.xlu0 %877
        %879 = vrot.lane.b32.xlu0 %v873, 91
        %v880 = vpop.permute.xlu0 %879
        %881 = vrot.lane.b32.xlu0 %v875, 91
        %v882 = vpop.permute.xlu0 %881
        %v883 = vsel %vm509, %v878, %v880
        %v884 = vsel %vm509, %v880, %v882
        %885 = vst [vmem:[#allocation1] ss:$4 sm:$0xff] %v768
        %v886 = vld.sshfl [vmem:[#allocation1] sm:$0xff pattern:$0x73625140]
        %v888 = vld.sshfl [vmem:[#allocation1 + $0x8] sm:$0xff pattern:$0x73625140]
        %v890 = vld.sshfl [vmem:[#allocation1 + $0x10] sm:$0xff pattern:$0x73625140]
        %892 = vrot.lane.b32.xlu0 %v886, 90
        %v893 = vpop.permute.xlu0 %892
        %894 = vrot.lane.b32.xlu0 %v888, 90
        %v895 = vpop.permute.xlu0 %894
        %896 = vrot.lane.b32.xlu0 %v890, 90
        %v897 = vpop.permute.xlu0 %896
        %v898 = vsel %vm525, %v893, %v895
        %v899 = vsel %vm525, %v895, %v897
        %v901 = vsel %vm528, %v771, %v788
        %v903 = vsel %vm528, %v772, %v789
        %v905 = vsel %vm528, %v773, %v787
        %v907 = vsel %vm535, %v901, %v804
        %v909 = vsel %vm535, %v903, %v805
        %v911 = vsel %vm535, %v905, %v803
        %v913 = vsel %vm542, %v907, %v820
        %v916 = vsel %vm542, %v909, %v821
        %v919 = vsel %vm542, %v911, %v819
        %v923 = vsel %vm528, %v835, %v851
        %v926 = vsel %vm528, %v836, %v852
        %v929 = vsel %vm528, %v834, %v850
        %v931 = vsel %vm535, %v923, %v867
        %v933 = vsel %vm535, %v926, %v868
        %v935 = vsel %vm535, %v929, %v866
        %v937 = vsel %vm542, %v931, %v883
        %v940 = vsel %vm542, %v933, %v884
        %v943 = vsel %vm542, %v935, %v882
        %v946 = vsel %vm528, %v898, 0
        %v949 = vsel %vm528, %v899, 0
        %v952 = vsel %vm528, %v897, 0
        %954 = vmatpush.bf16.msra.mxu0 0
        %955 = vmatpush.bf16.msra.mxu0 0
        %956 = vmatpush.bf16.msra.mxu0 0
        %957 = vmatpush.bf16.msra.mxu0 0
        %958 = vmatpush.bf16.msra.mxu0 0
        %959 = vmatpush.bf16.msra.mxu0 %v946
        %960 = vmatpush.bf16.msra.mxu0 %v937
        %961 = vmatpush.bf16.msra.mxu0 %v913
        %962 = vmatmul.bf16.gmra.mxu0 %v608
        %v963 = vpop.f32.mrf.mxu0
        %v964 = vadd.f32 %v579, %v963
        %v965 = vpop.f32.mrf.mxu0
        %v966 = vadd.f32 %v584, %v965
        %967 = vmatmul.bf16.gmra.mxu0 %v611
        %v968 = vpop.f32.mrf.mxu0
        %v969 = vadd.f32 %v589, %v968
        %v970 = vpop.f32.mrf.mxu0
        %v971 = vadd.f32 %v594, %v970
        %972 = vdwg.mxu0
        %973 = vmatpush.bf16.msra.mxu0 0
        %974 = vmatpush.bf16.msra.mxu0 0
        %975 = vmatpush.bf16.msra.mxu0 0
        %976 = vmatpush.bf16.msra.mxu0 0
        %977 = vmatpush.bf16.msra.mxu0 0
        %978 = vmatpush.bf16.msra.mxu0 %v949
        %979 = vmatpush.bf16.msra.mxu0 %v940
        %980 = vmatpush.bf16.msra.mxu0 %v916
        %981 = vmatmul.bf16.gmra.mxu0 %v608
        %v982 = vpop.f32.mrf.mxu0
        %v983 = vadd.f32 %v579, %v982
        %v984 = vpop.f32.mrf.mxu0
        %v985 = vadd.f32 %v584, %v984
        %986 = vmatmul.bf16.gmra.mxu0 %v611
        %v987 = vpop.f32.mrf.mxu0
        %v988 = vadd.f32 %v589, %v987
        %v989 = vpop.f32.mrf.mxu0
        %v990 = vadd.f32 %v594, %v989
        %991 = vdwg.mxu0
        %992 = vmatpush.bf16.msra.mxu0 0
        %993 = vmatpush.bf16.msra.mxu0 0
        %994 = vmatpush.bf16.msra.mxu0 0
        %995 = vmatpush.bf16.msra.mxu0 0
        %996 = vmatpush.bf16.msra.mxu0 0
        %997 = vmatpush.bf16.msra.mxu0 %v952
        %998 = vmatpush.bf16.msra.mxu0 %v943
        %999 = vmatpush.bf16.msra.mxu0 %v919
        %1000 = vmatmul.bf16.gmra.mxu0 %v608
        %v1001 = vpop.f32.mrf.mxu0
        %v1002 = vadd.f32 %v579, %v1001
        %v1003 = vpop.f32.mrf.mxu0
        %v1004 = vadd.f32 %v584, %v1003
        %1005 = vmatmul.bf16.gmra.mxu0 %v611
        %v1006 = vpop.f32.mrf.mxu0
        %v1007 = vadd.f32 %v589, %v1006
        %v1008 = vpop.f32.mrf.mxu0
        %v1009 = vadd.f32 %v594, %v1008
        %1010 = vdwg.mxu0
        %v1011 = vmax.f32 %v964, 0.0
        %v1012 = vmax.f32 %v983, 0.0
        %v1013 = vmax.f32 %v1002, 0.0
        %v1014 = vmax.f32 %v966, 0.0
        %v1015 = vmax.f32 %v985, 0.0
        %v1016 = vmax.f32 %v1004, 0.0
        %v1017 = vmax.f32 %v969, 0.0
        %v1018 = vmax.f32 %v988, 0.0
        %v1019 = vmax.f32 %v1007, 0.0
        %v1020 = vmax.f32 %v971, 0.0
        %v1021 = vmax.f32 %v990, 0.0
        %v1022 = vmax.f32 %v1009, 0.0
        %v1024 = vsel %vm691, %v1013, 0
        %v1027 = vsel %vm691, %v1016, 0
        %v1030 = vsel %vm691, %v1019, 0
        %v1033 = vsel %vm691, %v1022, 0
        %1035 = vmatpush.xpose.msra.mxu0 0.0
        %1036 = vmatpush.xpose.msra.mxu0 0.0
        %1037 = vmatpush.xpose.msra.mxu0 0.0
        %1038 = vmatpush.xpose.msra.mxu0 0.0
        %1039 = vmatpush.xpose.msra.mxu0 0.0
        %1040 = vmatpush.xpose.msra.mxu0 0.0
        %1041 = vmatpush.xpose.msra.mxu0 0.0
        %1042 = vmatpush.xpose.msra.mxu0 0.0
        %1043 = vmatpush.xpose.msra.mxu0 0.0
        %1044 = vmatpush.xpose.msra.mxu0 0.0
        %1045 = vmatpush.xpose.msra.mxu0 0.0
        %1046 = vmatpush.xpose.msra.mxu0 0.0
        %1047 = vmatpush.xpose.msra.mxu0 %v1020
        %1048 = vmatpush.xpose.msra.mxu0 %v1017
        %1049 = vmatpush.xpose.msra.mxu0 %v1014
        %1050 = vmatpush.xpose.msra.mxu0 %v1011
        %1051 = vmatmul.f32.gmra.mxu0 %v377
        %v1052 = vpop.f32.mrf.mxu0
        %v1053 = vadd.f32 0.0, %v1052
        %1054 = vdwg.mxu0
        %1055 = vmatpush.xpose.msra.mxu0 0.0
        %1056 = vmatpush.xpose.msra.mxu0 0.0
        %1057 = vmatpush.xpose.msra.mxu0 0.0
        %1058 = vmatpush.xpose.msra.mxu0 0.0
        %1059 = vmatpush.xpose.msra.mxu0 0.0
        %1060 = vmatpush.xpose.msra.mxu0 0.0
        %1061 = vmatpush.xpose.msra.mxu0 0.0
        %1062 = vmatpush.xpose.msra.mxu0 0.0
        %1063 = vmatpush.xpose.msra.mxu0 0.0
        %1064 = vmatpush.xpose.msra.mxu0 0.0
        %1065 = vmatpush.xpose.msra.mxu0 0.0
        %1066 = vmatpush.xpose.msra.mxu0 0.0
        %1067 = vmatpush.xpose.msra.mxu0 %v1021
        %1068 = vmatpush.xpose.msra.mxu0 %v1018
        %1069 = vmatpush.xpose.msra.mxu0 %v1015
        %1070 = vmatpush.xpose.msra.mxu0 %v1012
        %1071 = vmatmul.f32.gmra.mxu0 %v378
        %v1072 = vpop.f32.mrf.mxu0
        %v1073 = vadd.f32 %v1053, %v1072
        %1074 = vdwg.mxu0
        %1075 = vmatpush.xpose.msra.mxu0 0.0
        %1076 = vmatpush.xpose.msra.mxu0 0.0
        %1077 = vmatpush.xpose.msra.mxu0 0.0
        %1078 = vmatpush.xpose.msra.mxu0 0.0
        %1079 = vmatpush.xpose.msra.mxu0 0.0
        %1080 = vmatpush.xpose.msra.mxu0 0.0
        %1081 = vmatpush.xpose.msra.mxu0 0.0
        %1082 = vmatpush.xpose.msra.mxu0 0.0
        %1083 = vmatpush.xpose.msra.mxu0 0.0
        %1084 = vmatpush.xpose.msra.mxu0 0.0
        %1085 = vmatpush.xpose.msra.mxu0 0.0
        %1086 = vmatpush.xpose.msra.mxu0 0.0
        %1087 = vmatpush.xpose.msra.mxu0 %v1033
        %1088 = vmatpush.xpose.msra.mxu0 %v1030
        %1089 = vmatpush.xpose.msra.mxu0 %v1027
        %1090 = vmatpush.xpose.msra.mxu0 %v1024
        %1091 = vmatmul.f32.gmra.mxu0 %v693
        %v1092 = vpop.f32.mrf.mxu0
        %v1093 = vadd.f32 %v1073, %v1092
        %1094 = vdwg.mxu0
        %1096 = vrot.lane.b32.xlu0 %v1093, 32
        %v1097 = vpop.permute.xlu0 %1096
        %v1099 = vsel %vm691, %v765, %v1097
        %v1100 = vpack.c.bf16 %v1099, %v1099
        %v1101 = vld [vmem:[%s3] sm:$0xf]
        %v1102 = vld [vmem:[%s3 + $0x4] sm:$0xf]
        %v1103 = vld [vmem:[%s3 + $0x8] sm:$0xf]
        %v1104 = vld [vmem:[%s3 + $0xc] sm:$0xf]
        %v1105 = vld [vmem:[%s3 + $0x10] sm:$0xf]
        %v1106 = vld [vmem:[%s3 + $0x14] sm:$0xf]
        %v1107 = vld [vmem:[%s3 + $0x18] sm:$0xf]
        %v1108 = vld [vmem:[%s3 + $0x1c] sm:$0xf]
        %v1109 = vld [vmem:[%s4] sm:$0x1]
        %v1118 = vunpack.c.l.b16 %v1101
        %v1119 = vunpack.c.l.b16 %v1102
        %v1120 = vunpack.c.l.b16 %v1103
        %v1121 = vunpack.c.l.b16 %v1104
        %v1122 = vunpack.c.l.b16 %v1105
        %v1123 = vunpack.c.l.b16 %v1106
        %v1124 = vunpack.c.l.b16 %v1107
        %v1125 = vunpack.c.l.b16 %v1108
        %v1126 = vpack.c.b16 %v1119, %v1118
        %v1127 = vpack.c.b16 %v1121, %v1120
        %v1128 = vpack.c.b16 %v1123, %v1122
        %v1129 = vpack.c.b16 %v1125, %v1124
        %vm1134 = vcmask 523264
        %v1136 = vsel %vm1134, %v1100, 0
        %1138 = vmatpush.bf16.msra.mxu0 0
        %1139 = vmatpush.bf16.msra.mxu0 0
        %1140 = vmatpush.bf16.msra.mxu0 0
        %1141 = vmatpush.bf16.msra.mxu0 0
        %1142 = vmatpush.bf16.msra.mxu0 %v1129
        %1143 = vmatpush.bf16.msra.mxu0 %v1128
        %1144 = vmatpush.bf16.msra.mxu0 %v1127
        %1145 = vmatpush.bf16.msra.mxu0 %v1126
        %1146 = vmatmul.bf16.gmra.mxu0 %v1136
        %v1147 = vpop.f32.mrf.mxu0
        %v1148 = vadd.f32 %v1109, %v1147
        %v1149 = vpop.f32.mrf.mxu0
        %1150 = vdwg.mxu0
        %1151 = vst [vmem:[%s260] sm:$0x1] %v1148
        %s1152 = sand.u32 %s141, 1
        %s1153 = scalar_lea.sflag [#allocation4], %s1152
        %s1154 = sand.u32 %s141, 1
        %s1155 = scalar_lea.vmem [#allocation7], %s1154
        // Predicated region
        $region49: #{tpu_custom_call.1} parent=39 // pred_check
          %p1156 = pneg %p151
        $region50: #{tpu_custom_call.1} parent=39 // pred_check_branch
          %1158 = sbr.rel (%p1156) target = $region52
        $region51: #{tpu_custom_call.1} parent=39 // pred_region
          %1160 = vsyncadd %s1153, 0
          %s1161 = scalar_lea.hbm %s5, %s23
          %s1163 = sshll.u32 %s1155, 4
          %s1164 = int_to_ptr.vmem [resolvable:$true] %s1163
          %s1165 = sshll.u32 %s1161, 4
          %s1166 = int_to_ptr.hbm [resolvable:$true] %s1165
          %1168 = dma.vmem_to_hbm [thread:$0]  %s1164, 16, %s1166, %s1153
        $region52: #{tpu_custom_call.1} parent=39 // pred_fallthru
          _
      $region40: #{tpu_custom_call.1} parent=5 // pred_fallthru
        _
      %p1169 = scmp.le.s32.totalorder 2, %s18
      // Predicated region
      $region53: #{tpu_custom_call.1} parent=5 // pred_check
        %p1170 = pneg %p1169
      $region54: #{tpu_custom_call.1} parent=5 // pred_check_branch
        %1172 = sbr.rel (%p1170) target = $region56
      $region55: #{tpu_custom_call.1} parent=5 // pred_region
        %s1173 = ssub.s32 %s18, 2
        // Predicated region
        $region57: #{tpu_custom_call.1} parent=55 // pred_check
          %p1174 = pneg %p157
        $region58: #{tpu_custom_call.1} parent=55 // pred_check_branch
          %1176 = sbr.rel (%p1174) target = $region60
        $region59: #{tpu_custom_call.1} parent=55 // pred_region
          %s1177 = sand.u32 %s142, 1
          %s1178 = scalar_lea.sflag [#allocation4], %s1177
          %s1179 = sand.u32 %s142, 1
          %s1180 = scalar_lea.vmem [#allocation7], %s1179
          %1182 = dma.done %s1178, 16
        $region60: #{tpu_custom_call.1} parent=55 // pred_fallthru
          _
      $region56: #{tpu_custom_call.1} parent=5 // pred_fallthru
        _
    $region6: #{tpu_custom_call.1} parent=1 // loop_footer
      %s22 = sadd.s32 1, %s18
    $region7: #{tpu_custom_call.1} parent=1 // loop_footer_branch
      %17 = sbr.rel target = $region3
    $region8: #{tpu_custom_call.1} parent=1 // loop_exit
      _
    %1183 = vsyncpa [#allocation3], 1
    %s1184 = scalar_lea.sflag [#allocation3], 1
    %1185 = vsyncpa %s1184, 1
    %1186 = vsyncpa [#allocation6], 1
    %1187 = vsyncpa [#allocation4], 1
    %s1188 = scalar_lea.sflag [#allocation4], 1
    %1189 = vsyncpa %s1188, 1

</llo_original>
